<compile_context>
chip_gen: v5e
topology: v5e:2x2
jax: 0.10.0
libtpu: 0.0.40
codegen_flags: <defaults>
</compile_context>

<pallas_src>
import jax
import jax.numpy as jnp
from jax.experimental import pallas as pl
from jax.experimental.pallas import tpu as pltpu


def _make_beta_vae_kernel(R, TR, C, nk, ragged, batch_size, beta):
    inv_b = 1.0 / float(batch_size)
    beta = float(beta)

    def kernel(recon_ref, x_ref, mu_ref, logvar_ref, out_ref, acc_ref):
        k = pl.program_id(0)

        # ---- init accumulator / output block on the first reduction step ----
        @pl.when(k == 0)
        def _init():
            acc_ref[...] = jnp.zeros_like(acc_ref)
            out_ref[...] = jnp.zeros_like(out_ref)

        # ---- squared error for this (TR, C) slab tile (pure VPU) ------------
        diff = recon_ref[...].astype(jnp.float32) - x_ref[...].astype(jnp.float32)
        d2 = diff * diff

        if ragged:
            # Only the last row-block extends past R rows; zero the invalid
            # rows there.  valid_tail is a static Python int.
            valid_tail = R - (nk - 1) * TR

            @pl.when(k != nk - 1)
            def _body():
                acc_ref[...] += d2

            @pl.when(k == nk - 1)
            def _tail():
                row_ids = jax.lax.broadcasted_iota(jnp.int32, (TR, C), 0)
                acc_ref[...] += jnp.where(row_ids < valid_tail, d2, 0.0)
        else:
            acc_ref[...] += d2

        # ---- finalize: one cross-lane reduce + KL term, added exactly once --
        @pl.when(k == nk - 1)
        def _finalize():
            sse = jnp.sum(acc_ref[...])
            mu = mu_ref[...].astype(jnp.float32)
            logvar = logvar_ref[...].astype(jnp.float32)
            # mean over batch of  -0.5 * sum_d(1 + logvar - mu^2 - exp(logvar))
            kl = (-0.5 * inv_b) * jnp.sum(
                1.0 + logvar - mu * mu - jnp.exp(logvar))
            total = sse + jnp.float32(beta) * kl
            out_ref[...] = jnp.zeros_like(out_ref) + total

    return kernel


def beta_vae_loss_pallas(recon_x, x, mu, logvar, *, beta=1.0,
                         tile_bytes=1 << 20):
    """Pallas implementation of BetaVAELoss.forward."""
    B = x.shape[0]
    D = mu.shape[1]
    N = x.size

    # Lane-dense slab view of the reconstruction data (free reshapes).
    recon_flat = recon_x.reshape(-1)
    x_flat = x.reshape(-1)

    if N % 128 != 0:
        # Rare fallback: tiny zero-pad (< 128 elems) so a lane-dense slab
        # exists.  Zeros do not perturb the squared-error sum.
        pad = 128 - (N % 128)
        recon_flat = jnp.pad(recon_flat, (0, pad))
        x_flat = jnp.pad(x_flat, (0, pad))
        N = N + pad

    # Slab columns: largest "nice" multiple of 128 that divides N (no copy).
    C = 128
    for cand in (4096, 2048, 1024, 512, 256, 128):
        if N % cand == 0:
            C = cand
            break
    R = N // C
    recon2d = recon_flat.reshape(R, C)
    x2d = x_flat.reshape(R, C)

    # Row tile from a byte budget (~tile_bytes per input per grid step).
    itemsize = x.dtype.itemsize
    target_rows = max(1, int(tile_bytes) // (C * itemsize))
    if R <= 8:
        TR = R                                   # block row dim == full dim
    else:
        TR = min(R, target_rows)
        TR = max(8, (TR // 8) * 8)               # sublane-dense multiple of 8
    nk = pl.cdiv(R, TR)
    ragged = (R % TR) != 0

    kernel = _make_beta_vae_kernel(R, TR, C, nk, ragged, B, beta)

    feat_spec = pl.BlockSpec((TR, C), lambda k: (k, 0))
    lat_spec = pl.BlockSpec((B, D), lambda k: (0, 0))   # fetched once (const index)

    out = pl.pallas_call(
        kernel,
        out_shape=jax.ShapeDtypeStruct((8, 128), jnp.float32),
        grid=(nk,),
        in_specs=[feat_spec, feat_spec, lat_spec, lat_spec],
        out_specs=pl.BlockSpec((8, 128), lambda k: (0, 0)),
        scratch_shapes=[pltpu.VMEM((TR, C), jnp.float32)],
        compiler_params=pltpu.CompilerParams(
            dimension_semantics=("arbitrary",),
            # ~5-6 MiB actually used; 32 MiB is safe headroom on v5e/v6e/v7x.
            vmem_limit_bytes=32 * 1024 * 1024,
        ),
    )(recon2d, x2d, mu, logvar)

    return out[0, 0]


def _beta_vae_loss_ref(recon_x, x, mu, logvar, beta):
    """Pure-JAX reference mirroring the PyTorch module."""
    recon_loss = jnp.sum((recon_x.astype(jnp.float32) - x.astype(jnp.float32)) ** 2)
    mu = mu.astype(jnp.float32)
    logvar = logvar.astype(jnp.float32)
    kl = jnp.mean(-0.5 * jnp.sum(1.0 + logvar - mu ** 2 - jnp.exp(logvar), axis=1))
    return recon_loss + beta * kl


if __name__ == "__main__":
    key = jax.random.PRNGKey(0)

    # --- test 1: shapes consistent with the module's forward -----------------
    #   recon_x, x : (B, C, H, W) image batch; mu, logvar : (B, D) latents.
    B, Cc, H, W = 2, 4, 16, 16
    D = 32
    beta = 0.5

    k1, k2, k3, k4 = jax.random.split(key, 4)
    x = jax.random.normal(k1, (B, Cc, H, W), dtype=jnp.float32)
    recon_x = x + 0.1 * jax.random.normal(k2, (B, Cc, H, W), dtype=jnp.float32)
    mu = jax.random.normal(k3, (B, D), dtype=jnp.float32)
    logvar = 0.1 * jax.random.normal(k4, (B, D), dtype=jnp.float32)

    loss = jax.block_until_ready(beta_vae_loss_pallas(recon_x, x, mu, logvar, beta=beta))
    ref = jax.block_until_ready(_beta_vae_loss_ref(recon_x, x, mu, logvar, beta))
    assert jnp.isfinite(loss), f"non-finite loss: {loss}"
    assert jnp.allclose(loss, ref, rtol=1e-4, atol=1e-3), f"mismatch: {loss} vs {ref}"

    # --- test 2: exercise the multi-step + ragged-last-tile masked path ------
    B2, Cc2, H2, W2, D2 = 3, 3, 16, 16, 16      # N = 2304 -> slab (9, 256)
    k5, k6, k7, k8 = jax.random.split(jax.random.PRNGKey(1), 4)
    x2 = jax.random.normal(k5, (B2, Cc2, H2, W2), dtype=jnp.float32)
    recon2 = x2 + 0.2 * jax.random.normal(k6, (B2, Cc2, H2, W2), dtype=jnp.float32)
    mu2 = jax.random.normal(k7, (B2, D2), dtype=jnp.float32)
    logvar2 = 0.1 * jax.random.normal(k8, (B2, D2), dtype=jnp.float32)

    loss2 = jax.block_until_ready(
        beta_vae_loss_pallas(recon2, x2, mu2, logvar2, beta=beta, tile_bytes=8192))
    ref2 = jax.block_until_ready(_beta_vae_loss_ref(recon2, x2, mu2, logvar2, beta))
    assert jnp.allclose(loss2, ref2, rtol=1e-4, atol=1e-3), (
        f"mismatch (ragged tiled): {loss2} vs {ref2}")

    print("KERNEL_OK")
</pallas_src>

<mosaic_0001>
module attributes {stable_mosaic.version = 11 : i64} {
  func.func @kernel(%arg0: i32, %arg1: memref<1x2048xf32, #tpu.memory_space<vmem>>, %arg2: memref<1x2048xf32, #tpu.memory_space<vmem>>, %arg3: memref<2x32xf32, #tpu.memory_space<vmem>>, %arg4: memref<2x32xf32, #tpu.memory_space<vmem>>, %arg5: memref<8x128xf32, #tpu.memory_space<vmem>>, %arg6: memref<1x2048xf32, #tpu.memory_space<vmem>>) attributes {dimension_semantics = [#tpu.dimension_semantics<arbitrary>], iteration_bounds = array<i64: 1>, scalar_prefetch = 0 : i64, scratch_operands = 1 : i64, tpu.core_type = #tpu.core_type<tc>, window_params = [{transform_indices = @transform_0, window_bounds = array<i64: 1, 2048>}, {transform_indices = @transform_1, window_bounds = array<i64: 1, 2048>}, {pipeline_mode = #tpu.pipeline_mode<synchronous>, transform_indices = @transform_2, window_bounds = array<i64: 2, 32>}, {pipeline_mode = #tpu.pipeline_mode<synchronous>, transform_indices = @transform_3, window_bounds = array<i64: 2, 32>}, {pipeline_mode = #tpu.pipeline_mode<synchronous>, transform_indices = @transform_4, window_bounds = array<i64: 8, 128>}]} {
    %c0_i32 = arith.constant 0 : i32
    %0 = arith.cmpi eq, %arg0, %c0_i32 : i32
    %1 = arith.extui %0 : i1 to i32
    %c0_i32_0 = arith.constant 0 : i32
    %2 = arith.cmpi ne, %1, %c0_i32_0 : i32
    scf.if %2 {
      %cst = arith.constant 0.000000e+00 : f32
      %13 = vector.broadcast %cst : f32 to vector<1x2048xf32>
      %c0_10 = arith.constant 0 : index
      %c0_11 = arith.constant 0 : index
      %14 = vector.load %arg6[%c0_10, %c0_11] : memref<1x2048xf32, #tpu.memory_space<vmem>>, vector<1x2048xf32>
      tpu.vector_store %arg6[%c0_10, %c0_11], %13 {strides = array<i32>} : memref<1x2048xf32, #tpu.memory_space<vmem>>, vector<1x2048xf32>,
      %cst_12 = arith.constant 0.000000e+00 : f32
      %15 = vector.broadcast %cst_12 : f32 to vector<8x128xf32>
      %c0_13 = arith.constant 0 : index
      %c0_14 = arith.constant 0 : index
      %16 = vector.load %arg5[%c0_13, %c0_14] : memref<8x128xf32, #tpu.memory_space<vmem>>, vector<8x128xf32>
      tpu.vector_store %arg5[%c0_13, %c0_14], %15 {strides = array<i32>} : memref<8x128xf32, #tpu.memory_space<vmem>>, vector<8x128xf32>,
    } else {
    }
    %c0 = arith.constant 0 : index
    %c0_1 = arith.constant 0 : index
    %3 = vector.load %arg1[%c0, %c0_1] : memref<1x2048xf32, #tpu.memory_space<vmem>>, vector<1x2048xf32>
    %c0_2 = arith.constant 0 : index
    %c0_3 = arith.constant 0 : index
    %4 = vector.load %arg2[%c0_2, %c0_3] : memref<1x2048xf32, #tpu.memory_space<vmem>>, vector<1x2048xf32>
    %5 = arith.subf %3, %4 : vector<1x2048xf32>
    %6 = arith.mulf %5, %5 : vector<1x2048xf32>
    %c0_4 = arith.constant 0 : index
    %c0_5 = arith.constant 0 : index
    %7 = vector.load %arg6[%c0_4, %c0_5] : memref<1x2048xf32, #tpu.memory_space<vmem>>, vector<1x2048xf32>
    %8 = arith.addf %7, %6 : vector<1x2048xf32>
    %c0_6 = arith.constant 0 : index
    %c0_7 = arith.constant 0 : index
    %9 = vector.load %arg6[%c0_6, %c0_7] : memref<1x2048xf32, #tpu.memory_space<vmem>>, vector<1x2048xf32>
    tpu.vector_store %arg6[%c0_6, %c0_7], %8 {strides = array<i32>} : memref<1x2048xf32, #tpu.memory_space<vmem>>, vector<1x2048xf32>,
    %c0_i32_8 = arith.constant 0 : i32
    %10 = arith.cmpi eq, %arg0, %c0_i32_8 : i32
    %11 = arith.extui %10 : i1 to i32
    %c0_i32_9 = arith.constant 0 : i32
    %12 = arith.cmpi ne, %11, %c0_i32_9 : i32
    scf.if %12 {
      %c0_10 = arith.constant 0 : index
      %c0_11 = arith.constant 0 : index
      %13 = vector.load %arg6[%c0_10, %c0_11] : memref<1x2048xf32, #tpu.memory_space<vmem>>, vector<1x2048xf32>
      %14 = vector.shape_cast %13 : vector<1x2048xf32> to vector<1x1x2048xf32>
      %cst = arith.constant dense<0.000000e+00> : vector<1xf32>
      %15 = vector.multi_reduction <add>, %14, %cst [1, 2] : vector<1x1x2048xf32> to vector<1xf32>
      %16 = vector.shape_cast %15 : vector<1xf32> to vector<1x1x1xf32>
      %17 = vector.extract %16[0, 0, 0] : f32 from vector<1x1x1xf32>
      %c0_12 = arith.constant 0 : index
      %c0_13 = arith.constant 0 : index
      %18 = vector.load %arg3[%c0_12, %c0_13] : memref<2x32xf32, #tpu.memory_space<vmem>>, vector<2x32xf32>
      %c0_14 = arith.constant 0 : index
      %c0_15 = arith.constant 0 : index
      %19 = vector.load %arg4[%c0_14, %c0_15] : memref<2x32xf32, #tpu.memory_space<vmem>>, vector<2x32xf32>
      %cst_16 = arith.constant 1.000000e+00 : f32
      %20 = vector.broadcast %cst_16 : f32 to vector<2x32xf32>
      %21 = arith.addf %20, %19 : vector<2x32xf32>
      %22 = arith.mulf %18, %18 : vector<2x32xf32>
      %23 = arith.subf %21, %22 : vector<2x32xf32>
      %24 = math.exp %19 : vector<2x32xf32>
      %25 = arith.subf %23, %24 : vector<2x32xf32>
      %26 = vector.shape_cast %25 : vector<2x32xf32> to vector<1x2x32xf32>
      %cst_17 = arith.constant dense<0.000000e+00> : vector<1xf32>
      %27 = vector.multi_reduction <add>, %26, %cst_17 [1, 2] : vector<1x2x32xf32> to vector<1xf32>
      %28 = vector.shape_cast %27 : vector<1xf32> to vector<1x1x1xf32>
      %29 = vector.extract %28[0, 0, 0] : f32 from vector<1x1x1xf32>
      %cst_18 = arith.constant -2.500000e-01 : f32
      %30 = arith.mulf %cst_18, %29 : f32
      %cst_19 = arith.constant 5.000000e-01 : f32
      %31 = arith.mulf %cst_19, %30 : f32
      %32 = arith.addf %17, %31 : f32
      %cst_20 = arith.constant 0.000000e+00 : f32
      %33 = vector.broadcast %cst_20 : f32 to vector<8x128xf32>
      %34 = vector.broadcast %32 : f32 to vector<8x128xf32>
      %35 = arith.addf %33, %34 : vector<8x128xf32>
      %c0_21 = arith.constant 0 : index
      %c0_22 = arith.constant 0 : index
      %36 = vector.load %arg5[%c0_21, %c0_22] : memref<8x128xf32, #tpu.memory_space<vmem>>, vector<8x128xf32>
      tpu.vector_store %arg5[%c0_21, %c0_22], %35 {strides = array<i32>} : memref<8x128xf32, #tpu.memory_space<vmem>>, vector<8x128xf32>,
    } else {
    }
    return
  }
  func.func @transform_0(%arg0: i32) -> (i32, i32) {
    %c0_i32 = arith.constant 0 : i32
    %c0_i32_0 = arith.constant 0 : i32
    return %arg0, %c0_i32 : i32, i32
  }
  func.func @transform_1(%arg0: i32) -> (i32, i32) {
    %c0_i32 = arith.constant 0 : i32
    %c0_i32_0 = arith.constant 0 : i32
    return %arg0, %c0_i32 : i32, i32
  }
  func.func @transform_2(%arg0: i32) -> (i32, i32) {
    %c0_i32 = arith.constant 0 : i32
    %c0_i32_0 = arith.constant 0 : i32
    %c0_i32_1 = arith.constant 0 : i32
    return %c0_i32, %c0_i32_0 : i32, i32
  }
  func.func @transform_3(%arg0: i32) -> (i32, i32) {
    %c0_i32 = arith.constant 0 : i32
    %c0_i32_0 = arith.constant 0 : i32
    %c0_i32_1 = arith.constant 0 : i32
    return %c0_i32, %c0_i32_0 : i32, i32
  }
  func.func @transform_4(%arg0: i32) -> (i32, i32) {
    %c0_i32 = arith.constant 0 : i32
    %c0_i32_0 = arith.constant 0 : i32
    %c0_i32_1 = arith.constant 0 : i32
    return %c0_i32, %c0_i32_0 : i32, i32
  }
}

</mosaic_0001>

<llo_original>
// kernel: tpu_custom_call.1
$region0: #{tpu_custom_call.1}
  #allocation0 [shape = 'u32[]', space=smem, size = 0x4, offset = 0x4, fixed_abs, tag = 'smem constant byte address 0x4 - core index']
  #allocation1 [shape = 'u32[72,128]{1,0:T(1,128)}', space=vmem, size = 0x9000, scoped, tag = 'internal scratch']
  #allocation2 [shape = 'f32[1,2048]{1,0:T(1,128)}', space=vmem, size = 0x2000, scoped, tag = 'scratch operand']
  %s0 = inlined_call_operand.hbm [shape: f32[1,2048], index: 0, kind: input, shape index: {}]
  %s1 = inlined_call_operand.hbm [shape: f32[1,2048], index: 1, kind: input, shape index: {}]
  %s2 = inlined_call_operand.hbm [shape: f32[2,32], index: 2, kind: input, shape index: {}]
  %s3 = inlined_call_operand.vmem [shape: f32[2,32], index: 3, kind: input, shape index: {}]
  %s4 = inlined_call_operand.hbm [shape: f32[8,128], index: 4, kind: output, shape index: {}]
  %s5 = sld [smem:[#allocation0]]
  $region46: #{tpu_custom_call.1} parent=0
    _
  %s7 = ssub.s32 1, %s5
  %s8 = scalar_select 0, %s7, %s5
  $region1: #{tpu_custom_call.1} parent=0
    #allocation3 [shape = 'u8[8192]{0}', space=vmem, size = 0x2000, scoped, tag = 'input window, operand 0, single buffered']
    #allocation4 [shape = 's32[1]{0}', space=sflag, size = 0x4, scoped, tag = 'scoped memory for tpu_custom_call.1']
    #allocation5 [shape = 's32[1]{0}', space=sflag, size = 0x4, scoped, tag = 'scoped memory for tpu_custom_call.1']
    #allocation6 [shape = 'u8[8192]{0}', space=vmem, size = 0x2000, scoped, tag = 'input window, operand 1, single buffered']
    #allocation7 [shape = 's32[1]{0}', space=sflag, size = 0x4, scoped, tag = 'scoped memory for tpu_custom_call.1']
    #allocation8 [shape = 'u8[1024]{0}', space=vmem, size = 0x400, scoped, tag = 'input window, operand 2, single buffered']
    #allocation9 [shape = 'u8[4096]{0}', space=vmem, size = 0x1000, scoped, tag = 'output window, operand 0, single buffered']
    %9 = vsyncpa [#allocation4], 0
    %10 = vsyncpa [#allocation7], 0
    %11 = vsyncpa [#allocation5], 0
    // Predicated region
    $region2: #{tpu_custom_call.1} parent=1 // pred_check
      _
    $region3: #{tpu_custom_call.1} parent=1 // pred_check_branch
      %13 = sbr.rel (0) target = $region5
    $region4: #{tpu_custom_call.1} parent=1 // pred_region
      %15 = vsyncadd [#allocation4], 0
      %s17 = sshll.u32 %s0, 4
      %s18 = int_to_ptr.hbm [resolvable:$true] %s17
      %s19 = sshll.u32 [#allocation3], 4
      %s20 = int_to_ptr.vmem [resolvable:$true] %s19
      %22 = dma.hbm_to_vmem [thread:$0]  %s18, 256, %s20, [#allocation4]
    $region5: #{tpu_custom_call.1} parent=1 // pred_fallthru
      _
    // Predicated region
    $region6: #{tpu_custom_call.1} parent=1 // pred_check
      _
    $region7: #{tpu_custom_call.1} parent=1 // pred_check_branch
      %24 = sbr.rel (0) target = $region9
    $region8: #{tpu_custom_call.1} parent=1 // pred_region
      %26 = vsyncadd [#allocation7], 0
      %s28 = sshll.u32 %s1, 4
      %s29 = int_to_ptr.hbm [resolvable:$true] %s28
      %s30 = sshll.u32 [#allocation6], 4
      %s31 = int_to_ptr.vmem [resolvable:$true] %s30
      %33 = dma.hbm_to_vmem [thread:$0]  %s29, 256, %s31, [#allocation7]
    $region9: #{tpu_custom_call.1} parent=1 // pred_fallthru
      _
    // Predicated region
    $region10: #{tpu_custom_call.1} parent=1 // pred_check
      _
    $region11: #{tpu_custom_call.1} parent=1 // pred_check_branch
      %35 = sbr.rel (0) target = $region13
    $region12: #{tpu_custom_call.1} parent=1 // pred_region
      %37 = vsyncadd [#allocation7], 0
      %s39 = sshll.u32 %s2, 4
      %s40 = int_to_ptr.hbm [resolvable:$true] %s39
      %s41 = sshll.u32 [#allocation8], 4
      %s42 = int_to_ptr.vmem [resolvable:$true] %s41
      %44 = dma.hbm_to_vmem [thread:$0]  %s40, 32, %s42, [#allocation7]
    $region13: #{tpu_custom_call.1} parent=1 // pred_fallthru
      _
    // Predicated region
    $region14: #{tpu_custom_call.1} parent=1 // pred_check
      _
    $region15: #{tpu_custom_call.1} parent=1 // pred_check_branch
      %46 = sbr.rel (0) target = $region17
    $region16: #{tpu_custom_call.1} parent=1 // pred_region
      _
    $region17: #{tpu_custom_call.1} parent=1 // pred_fallthru
      _
    // Predicated region
    $region18: #{tpu_custom_call.1} parent=1 // pred_check
      _
    $region19: #{tpu_custom_call.1} parent=1 // pred_check_branch
      %48 = sbr.rel (0) target = $region21
    $region20: #{tpu_custom_call.1} parent=1 // pred_region
      %50 = dma.done [#allocation4], 256
    $region21: #{tpu_custom_call.1} parent=1 // pred_fallthru
      _
    // Predicated region
    $region22: #{tpu_custom_call.1} parent=1 // pred_check
      _
    $region23: #{tpu_custom_call.1} parent=1 // pred_check_branch
      %52 = sbr.rel (0) target = $region25
    $region24: #{tpu_custom_call.1} parent=1 // pred_region
      %54 = dma.done [#allocation7], 256
    $region25: #{tpu_custom_call.1} parent=1 // pred_fallthru
      _
    // Predicated region
    $region26: #{tpu_custom_call.1} parent=1 // pred_check
      _
    $region27: #{tpu_custom_call.1} parent=1 // pred_check_branch
      %56 = sbr.rel (0) target = $region29
    $region28: #{tpu_custom_call.1} parent=1 // pred_region
      %58 = dma.done [#allocation7], 32
    $region29: #{tpu_custom_call.1} parent=1 // pred_fallthru
      _
    %p59 = scmp.eq.s32.totalorder 0, 0
    // Predicated region
    $region30: #{tpu_custom_call.1} parent=1 // pred_check
      %p60 = pneg %p59
    $region31: #{tpu_custom_call.1} parent=1 // pred_check_branch
      %62 = sbr.rel (%p60) target = $region33
    $region32: #{tpu_custom_call.1} parent=1 // pred_region
      %63 = vst [vmem:[#allocation2] sm:$0xff] 0.0
      %64 = vst [vmem:[#allocation2 + $0x8] sm:$0xff] 0.0
      %65 = vst [vmem:[#allocation9] sm:$0xff] 0.0
    $region33: #{tpu_custom_call.1} parent=1 // pred_fallthru
      _
    %v66 = vld [vmem:[#allocation3] sm:$0xff]
    %v67 = vld [vmem:[#allocation3 + $0x8] sm:$0xff]
    %v68 = vld [vmem:[#allocation6] sm:$0xff]
    %v69 = vld [vmem:[#allocation6 + $0x8] sm:$0xff]
    %v70 = vsub.f32 %v66, %v68
    %v71 = vsub.f32 %v67, %v69
    %v72 = vmul.f32 %v70, %v70
    %v73 = vmul.f32 %v71, %v71
    %v74 = vld [vmem:[#allocation2] sm:$0xff]
    %v75 = vld [vmem:[#allocation2 + $0x8] sm:$0xff]
    %v76 = vadd.f32 %v74, %v72
    %v77 = vadd.f32 %v75, %v73
    %78 = vst [vmem:[#allocation2] sm:$0xff] %v76
    %79 = vst [vmem:[#allocation2 + $0x8] sm:$0xff] %v77
    // Predicated region
    $region34: #{tpu_custom_call.1} parent=1 // pred_check
      %p80 = pneg %p59
    $region35: #{tpu_custom_call.1} parent=1 // pred_check_branch
      %82 = sbr.rel (%p80) target = $region37
    $region36: #{tpu_custom_call.1} parent=1 // pred_region
      %v83 = vld [vmem:[#allocation2] sm:$0xff]
      %v84 = vld [vmem:[#allocation2 + $0x8] sm:$0xff]
      %v87 = vperm.slane %v83, 0
      %v88 = vperm.slane %v83, 1
      %v89 = vperm.slane %v83, 2
      %v90 = vperm.slane %v83, 3
      %v91 = vperm.slane %v83, 4
      %v92 = vperm.slane %v83, 5
      %v93 = vperm.slane %v83, 6
      %v94 = vperm.slane %v83, 7
      %v95 = vperm.slane %v84, 0
      %v96 = vperm.slane %v84, 1
      %v97 = vperm.slane %v84, 2
      %v98 = vperm.slane %v84, 3
      %v99 = vperm.slane %v84, 4
      %v100 = vperm.slane %v84, 5
      %v101 = vperm.slane %v84, 6
      %v102 = vperm.slane %v84, 7
      %vm119 = vcmask 1040384
      %v120 = vsel %vm119, %v87, 0.0
      %v121 = vsel %vm119, %v88, 0.0
      %v122 = vadd.f32 %v120, %v121
      %v123 = vsel %vm119, %v89, 0.0
      %v124 = vadd.f32 %v122, %v123
      %v125 = vsel %vm119, %v90, 0.0
      %v126 = vadd.f32 %v124, %v125
      %v127 = vsel %vm119, %v91, 0.0
      %v128 = vadd.f32 %v126, %v127
      %v129 = vsel %vm119, %v92, 0.0
      %v130 = vadd.f32 %v128, %v129
      %v131 = vsel %vm119, %v93, 0.0
      %v132 = vadd.f32 %v130, %v131
      %v133 = vsel %vm119, %v94, 0.0
      %v134 = vadd.f32 %v132, %v133
      %v135 = vsel %vm119, %v95, 0.0
      %v136 = vadd.f32 %v134, %v135
      %v137 = vsel %vm119, %v96, 0.0
      %v138 = vadd.f32 %v136, %v137
      %v139 = vsel %vm119, %v97, 0.0
      %v140 = vadd.f32 %v138, %v139
      %v141 = vsel %vm119, %v98, 0.0
      %v142 = vadd.f32 %v140, %v141
      %v143 = vsel %vm119, %v99, 0.0
      %v144 = vadd.f32 %v142, %v143
      %v145 = vsel %vm119, %v100, 0.0
      %v146 = vadd.f32 %v144, %v145
      %v147 = vsel %vm119, %v101, 0.0
      %v148 = vadd.f32 %v146, %v147
      %v149 = vsel %vm119, %v102, 0.0
      %v150 = vadd.f32 %v148, %v149
      %151 = vadd.xlane.f32.xlu0 %v150
      %v152 = vpop.xlane.xlu0 %151
      %v153 = vrot.slane %v152, 4
      %v154 = vadd.f32 %v152, %v153
      %v155 = vrot.slane %v154, 2
      %v156 = vadd.f32 %v154, %v155
      %v157 = vrot.slane %v156, 1
      %v158 = vadd.f32 %v156, %v157
      %s159 = vtos %v158
      %v160 = vld [vmem:[#allocation8] sm:$0x3]
      %v161 = vld [vmem:[%s3] sm:$0x3]
      %v162 = vadd.f32 %v161, 1.0
      %v163 = vmul.f32 %v160, %v160
      %v164 = vsub.f32 %v162, %v163
      %v165 = vmul.f32 %v161, 1.442695
      %v166 = vpow.pop %v165
      %v167 = vsub.f32 %v164, %v166
      %vm168 = vcmask 254976
      %v169 = vsel %vm168, %v167, 0.0
      %170 = vadd.xlane.f32.xlu0 %v169
      %v171 = vpop.xlane.xlu0 %170
      %v172 = vrot.slane %v171, 4
      %v173 = vadd.f32 %v171, %v172
      %v174 = vrot.slane %v173, 2
      %v175 = vadd.f32 %v173, %v174
      %v176 = vrot.slane %v175, 1
      %v177 = vadd.f32 %v175, %v176
      %s178 = vtos %v177
      %s179 = smul.f32 %s178, -0.25
      %s180 = smul.f32 %s179, 0.5
      %s181 = sadd.f32 %s159, %s180
      %v182 = vstv %s181
      %v183 = vadd.f32 %v182, 0.0
      %184 = vst [vmem:[#allocation9] sm:$0xff] %v183
    $region37: #{tpu_custom_call.1} parent=1 // pred_fallthru
      _
    // Predicated region
    $region38: #{tpu_custom_call.1} parent=1 // pred_check
      _
    $region39: #{tpu_custom_call.1} parent=1 // pred_check_branch
      %186 = sbr.rel (0) target = $region41
    $region40: #{tpu_custom_call.1} parent=1 // pred_region
      %188 = vsyncadd [#allocation5], 0
      %s190 = sshll.u32 [#allocation9], 4
      %s191 = int_to_ptr.vmem [resolvable:$true] %s190
      %s192 = sshll.u32 %s4, 4
      %s193 = int_to_ptr.hbm [resolvable:$true] %s192
      %195 = dma.vmem_to_hbm [thread:$0]  %s191, 128, %s193, [#allocation5]
    $region41: #{tpu_custom_call.1} parent=1 // pred_fallthru
      _
    // Predicated region
    $region42: #{tpu_custom_call.1} parent=1 // pred_check
      _
    $region43: #{tpu_custom_call.1} parent=1 // pred_check_branch
      %197 = sbr.rel (0) target = $region45
    $region44: #{tpu_custom_call.1} parent=1 // pred_region
      %199 = dma.done [#allocation5], 128
    $region45: #{tpu_custom_call.1} parent=1 // pred_fallthru
      _
    %200 = vsyncpa [#allocation4], 1
    %201 = vsyncpa [#allocation7], 1
    %202 = vsyncpa [#allocation5], 1

</llo_original>
